<compile_context>
chip_gen: v6e
topology: v6e:2x2x1
jax: 0.10.0
libtpu: 0.0.40
codegen_flags: <defaults>
</compile_context>

<pallas_src>
import functools

import jax
import jax.numpy as jnp
from jax.experimental import pallas as pl
from jax.experimental.pallas import tpu as pltpu


# ----------------------------- Pallas kernel ------------------------------- #

def _cscore_fpe_loss_kernel(ds_dt_ref, target_ref, alpha_ref, beta_ref, std_ref,
                            *out_refs, metrics):
    # Stream in native dtype, do all math in f32 (keeps 1e-5 tolerance even
    # when ds_dt/target arrive as bf16).
    ds_dt = ds_dt_ref[...].astype(jnp.float32)    # (TB, D)
    target = target_ref[...].astype(jnp.float32)  # (TB, D)
    alpha = alpha_ref[...].astype(jnp.float32)    # (TB, 1)
    beta = beta_ref[...].astype(jnp.float32)      # (TB, 1)
    std = std_ref[...].astype(jnp.float32)        # (TB, 1)

    # Hoist per-row scalar algebra to (TB, 1) before broadcasting over lanes:
    # only two full-width (TB, D) multiplies + one subtract remain.
    coef = 0.5 * beta * (alpha * alpha)           # (TB, 1)
    std3 = std * std * std                        # (TB, 1)
    resid = std3 * ds_dt - coef * target          # (TB, D)

    for metric, o_ref in zip(metrics, out_refs):
        if metric == 'L2':
            o_ref[...] = jnp.sum(resid * resid, axis=1, keepdims=True)
        elif metric == 'L1':
            o_ref[...] = jnp.sum(jnp.abs(resid), axis=1, keepdims=True)
        else:
            raise ValueError(f"unknown metric {metric!r}")


# ----------------------------- Wrapper ------------------------------------- #

def _choose_batch_tile(B, D, itemsize, vmem_budget_bytes=8 * 1024 * 1024):
    """Largest TB (multiple of 8) so 2 streamed inputs x 2 pipeline buffers of
    (TB, D) fit a conservative VMEM budget (safe on v5e 16 MiB / v7x 64 MiB)."""
    per_row = 4 * D * itemsize            # 2 inputs x 2 buffers
    tb = max(8, vmem_budget_bytes // max(per_row, 1))
    tb = (tb // 8) * 8
    tb = min(tb, 1024)                    # diminishing returns past ~512-1024 rows
    b_pad8 = ((B + 7) // 8) * 8
    return max(8, min(tb, b_pad8))


def _cscore_fpe_loss_pallas(ds_dt, target, alpha, beta, std, metrics):
    B, D = ds_dt.shape
    alpha = alpha.reshape(B, 1)
    beta = beta.reshape(B, 1)
    std = std.reshape(B, 1)

    tb = _choose_batch_tile(B, D, jnp.dtype(ds_dt.dtype).itemsize)
    n_tiles = pl.cdiv(B, tb)
    Bp = n_tiles * tb

    if Bp != B:
        # Zero-padded rows yield loss 0 and are sliced off below.
        pad = ((0, Bp - B), (0, 0))
        ds_dt = jnp.pad(ds_dt, pad)
        target = jnp.pad(target, pad)
        alpha = jnp.pad(alpha, pad)
        beta = jnp.pad(beta, pad)
        std = jnp.pad(std, pad)

    kernel = functools.partial(_cscore_fpe_loss_kernel, metrics=tuple(metrics))

    row_spec = pl.BlockSpec((tb, D), lambda i: (i, 0))
    col_spec = pl.BlockSpec((tb, 1), lambda i: (i, 0))

    outs = pl.pallas_call(
        kernel,
        out_shape=tuple(jax.ShapeDtypeStruct((Bp, 1), jnp.float32)
                        for _ in metrics),
        grid=(n_tiles,),
        in_specs=[row_spec, row_spec, col_spec, col_spec, col_spec],
        out_specs=tuple(pl.BlockSpec((tb, 1), lambda i: (i, 0))
                        for _ in metrics),
        compiler_params=pltpu.CompilerParams(
            dimension_semantics=("parallel",)),
    )(ds_dt, target, alpha, beta, std)

    return tuple(o[:B, 0] for o in outs)


def conditional_score_fpe_loss(ds_dt, target, alpha, beta, std, metric='L2'):
    """Pallas implementation of ConditionalScoreFPELoss.forward given ds/dt."""
    (loss,) = _cscore_fpe_loss_pallas(ds_dt, target, alpha, beta, std, (metric,))
    return loss


def conditional_score_fpe_loss_fused(ds_dt, target, alpha, beta, std,
                                     metrics=('L2', 'L1')):
    """Compute several metrics in a single pass over ds_dt/target (halves HBM
    traffic vs. two separate calls)."""
    return _cscore_fpe_loss_pallas(ds_dt, target, alpha, beta, std, metrics)


# ----------------------------- JAX glue ------------------------------------ #
# TODO(synk): torch.autograd.grad on an externally built graph has no in-kernel
# Pallas equivalent; batch_gradient is reproduced with jax.jvp on a synthetic
# score network (per-sample output depends only on its own t[b], so the JVP
# with a ones tangent equals the per-column gradients of the PyTorch helper).

def score_net(t, cond, params):
    """Synthetic score network s(t, cond): (B,), (B, D) -> (B, D)."""
    Wt, Wc, b1, W2, b2 = params
    h = jnp.tanh(t[:, None] * Wt[None, :] + cond @ Wc + b1[None, :])  # (B, H)
    return h @ W2 + b2[None, :]                                       # (B, D)


def batch_gradient_jax(f, t):
    """Returns (s, ds_dt) with ds_dt[b, i] = d s[b, i] / d t[b]."""
    s, ds_dt = jax.jvp(f, (t,), (jnp.ones_like(t),))
    return s, ds_dt


# ----------------------------- Example run --------------------------------- #

if __name__ == "__main__":
    B, D, H = 8, 32, 16

    key = jax.random.PRNGKey(0)
    k = jax.random.split(key, 10)

    # deterministic synthetic "score network" parameters
    Wt = 0.1 * jax.random.normal(k[0], (H,), jnp.float32)
    Wc = 0.1 * jax.random.normal(k[1], (D, H), jnp.float32)
    b1 = 0.01 * jax.random.normal(k[2], (H,), jnp.float32)
    W2 = 0.1 * jax.random.normal(k[3], (H, D), jnp.float32)
    b2 = 0.01 * jax.random.normal(k[4], (D,), jnp.float32)
    params = (Wt, Wc, b1, W2, b2)

    # forward inputs
    t = jax.random.uniform(k[5], (B,), jnp.float32, 0.01, 1.0)
    cond = jax.random.normal(k[6], (B, D), jnp.float32)
    target = jax.random.normal(k[7], (B, D), jnp.float32)
    alpha = jax.random.uniform(k[8], (B, 1), jnp.float32, 0.5, 1.0)
    beta = jax.random.uniform(k[9], (B, 1), jnp.float32, 0.1, 2.0)
    std = jnp.sqrt(1.0 - alpha ** 2 + 1e-4)

    # s and ds/dt (replaces the autograd-based batch_gradient)
    s, ds_dt = batch_gradient_jax(lambda tt: score_net(tt, cond, params), t)

    # Pallas kernel: fused L2 + L1 in a single streaming pass
    loss_l2, loss_l1 = conditional_score_fpe_loss_fused(
        ds_dt, target, alpha, beta, std, metrics=('L2', 'L1'))

    # single-metric API (matches the PyTorch module's forward)
    loss_l2_single = conditional_score_fpe_loss(
        ds_dt, target, alpha, beta, std, metric='L2')
    jax.block_until_ready((loss_l2, loss_l1, loss_l2_single))

    # reference check in plain JAX
    u = 0.5 * target * beta * alpha ** 2
    resid = std ** 3 * ds_dt - u
    ref_l2 = jnp.sum(resid ** 2, axis=1)
    ref_l1 = jnp.sum(jnp.abs(resid), axis=1)
    assert jnp.allclose(loss_l2, ref_l2, atol=1e-5, rtol=1e-5)
    assert jnp.allclose(loss_l1, ref_l1, atol=1e-5, rtol=1e-5)
    assert jnp.allclose(loss_l2_single, ref_l2, atol=1e-5, rtol=1e-5)

    print("KERNEL_OK")
</pallas_src>

<mosaic_0001>
module attributes {stable_mosaic.version = 11 : i64} {
  func.func @_cscore_fpe_loss_kernel(%arg0: i32, %arg1: memref<8x32xf32, #tpu.memory_space<vmem>>, %arg2: memref<8x32xf32, #tpu.memory_space<vmem>>, %arg3: memref<8x1xf32, #tpu.memory_space<vmem>>, %arg4: memref<8x1xf32, #tpu.memory_space<vmem>>, %arg5: memref<8x1xf32, #tpu.memory_space<vmem>>, %arg6: memref<8x1xf32, #tpu.memory_space<vmem>>, %arg7: memref<8x1xf32, #tpu.memory_space<vmem>>) attributes {dimension_semantics = [#tpu.dimension_semantics<parallel>], iteration_bounds = array<i64: 1>, scalar_prefetch = 0 : i64, scratch_operands = 0 : i64, tpu.core_type = #tpu.core_type<tc>, window_params = [{transform_indices = @transform_0, window_bounds = array<i64: 8, 32>}, {transform_indices = @transform_1, window_bounds = array<i64: 8, 32>}, {transform_indices = @transform_2, window_bounds = array<i64: 8, 1>}, {transform_indices = @transform_3, window_bounds = array<i64: 8, 1>}, {transform_indices = @transform_4, window_bounds = array<i64: 8, 1>}, {transform_indices = @transform_5, window_bounds = array<i64: 8, 1>}, {transform_indices = @transform_6, window_bounds = array<i64: 8, 1>}]} {
    %c0 = arith.constant 0 : index
    %c0_0 = arith.constant 0 : index
    %0 = vector.load %arg1[%c0, %c0_0] : memref<8x32xf32, #tpu.memory_space<vmem>>, vector<8x32xf32>
    %c0_1 = arith.constant 0 : index
    %c0_2 = arith.constant 0 : index
    %1 = vector.load %arg2[%c0_1, %c0_2] : memref<8x32xf32, #tpu.memory_space<vmem>>, vector<8x32xf32>
    %c0_3 = arith.constant 0 : index
    %c0_4 = arith.constant 0 : index
    %2 = vector.load %arg3[%c0_3, %c0_4] : memref<8x1xf32, #tpu.memory_space<vmem>>, vector<8x1xf32>
    %c0_5 = arith.constant 0 : index
    %c0_6 = arith.constant 0 : index
    %3 = vector.load %arg4[%c0_5, %c0_6] : memref<8x1xf32, #tpu.memory_space<vmem>>, vector<8x1xf32>
    %c0_7 = arith.constant 0 : index
    %c0_8 = arith.constant 0 : index
    %4 = vector.load %arg5[%c0_7, %c0_8] : memref<8x1xf32, #tpu.memory_space<vmem>>, vector<8x1xf32>
    %cst = arith.constant 5.000000e-01 : f32
    %5 = vector.broadcast %cst : f32 to vector<8x1xf32>
    %6 = arith.mulf %5, %3 : vector<8x1xf32>
    %7 = arith.mulf %2, %2 : vector<8x1xf32>
    %8 = arith.mulf %6, %7 : vector<8x1xf32>
    %9 = arith.mulf %4, %4 : vector<8x1xf32>
    %10 = arith.mulf %9, %4 : vector<8x1xf32>
    %11 = vector.broadcast %10 : vector<8x1xf32> to vector<8x32xf32>
    %12 = arith.mulf %11, %0 : vector<8x32xf32>
    %13 = vector.broadcast %8 : vector<8x1xf32> to vector<8x32xf32>
    %14 = arith.mulf %13, %1 : vector<8x32xf32>
    %15 = arith.subf %12, %14 : vector<8x32xf32>
    %16 = arith.mulf %15, %15 : vector<8x32xf32>
    %cst_9 = arith.constant dense<0.000000e+00> : vector<8xf32>
    %17 = vector.multi_reduction <add>, %16, %cst_9 [1] : vector<8x32xf32> to vector<8xf32>
    %18 = vector.shape_cast %17 : vector<8xf32> to vector<8x1xf32>
    %c0_10 = arith.constant 0 : index
    %c0_11 = arith.constant 0 : index
    %19 = vector.load %arg6[%c0_10, %c0_11] : memref<8x1xf32, #tpu.memory_space<vmem>>, vector<8x1xf32>
    tpu.vector_store %arg6[%c0_10, %c0_11], %18 {strides = array<i32>} : memref<8x1xf32, #tpu.memory_space<vmem>>, vector<8x1xf32>,
    %20 = math.absf %15 : vector<8x32xf32>
    %cst_12 = arith.constant dense<0.000000e+00> : vector<8xf32>
    %21 = vector.multi_reduction <add>, %20, %cst_12 [1] : vector<8x32xf32> to vector<8xf32>
    %22 = vector.shape_cast %21 : vector<8xf32> to vector<8x1xf32>
    %c0_13 = arith.constant 0 : index
    %c0_14 = arith.constant 0 : index
    %23 = vector.load %arg7[%c0_13, %c0_14] : memref<8x1xf32, #tpu.memory_space<vmem>>, vector<8x1xf32>
    tpu.vector_store %arg7[%c0_13, %c0_14], %22 {strides = array<i32>} : memref<8x1xf32, #tpu.memory_space<vmem>>, vector<8x1xf32>,
    return
  }
  func.func @transform_0(%arg0: i32) -> (i32, i32) {
    %c0_i32 = arith.constant 0 : i32
    %c0_i32_0 = arith.constant 0 : i32
    return %arg0, %c0_i32 : i32, i32
  }
  func.func @transform_1(%arg0: i32) -> (i32, i32) {
    %c0_i32 = arith.constant 0 : i32
    %c0_i32_0 = arith.constant 0 : i32
    return %arg0, %c0_i32 : i32, i32
  }
  func.func @transform_2(%arg0: i32) -> (i32, i32) {
    %c0_i32 = arith.constant 0 : i32
    %c0_i32_0 = arith.constant 0 : i32
    return %arg0, %c0_i32 : i32, i32
  }
  func.func @transform_3(%arg0: i32) -> (i32, i32) {
    %c0_i32 = arith.constant 0 : i32
    %c0_i32_0 = arith.constant 0 : i32
    return %arg0, %c0_i32 : i32, i32
  }
  func.func @transform_4(%arg0: i32) -> (i32, i32) {
    %c0_i32 = arith.constant 0 : i32
    %c0_i32_0 = arith.constant 0 : i32
    return %arg0, %c0_i32 : i32, i32
  }
  func.func @transform_5(%arg0: i32) -> (i32, i32) {
    %c0_i32 = arith.constant 0 : i32
    %c0_i32_0 = arith.constant 0 : i32
    return %arg0, %c0_i32 : i32, i32
  }
  func.func @transform_6(%arg0: i32) -> (i32, i32) {
    %c0_i32 = arith.constant 0 : i32
    %c0_i32_0 = arith.constant 0 : i32
    return %arg0, %c0_i32 : i32, i32
  }
}

</mosaic_0001>

<llo_original>
// kernel: tpu_custom_call.1
$region0: #{tpu_custom_call.1}
  #allocation0 [shape = 'u32[]', space=smem, size = 0x4, offset = 0x4, fixed_abs, tag = 'smem constant byte address 0x4 - core index']
  #allocation1 [shape = 'u32[144,128]{1,0:T(1,128)}', space=vmem, size = 0x12000, scoped, tag = 'internal scratch']
  %s0 = inlined_call_operand.vmem [shape: f32[8,32], index: 0, kind: input, shape index: {}]
  %s1 = inlined_call_operand.vmem [shape: f32[8,32], index: 1, kind: input, shape index: {}]
  %s2 = inlined_call_operand.vmem [shape: f32[8,1], index: 2, kind: input, shape index: {}]
  %s3 = inlined_call_operand.vmem [shape: f32[8,1], index: 3, kind: input, shape index: {}]
  %s4 = inlined_call_operand.vmem [shape: f32[8,1], index: 4, kind: input, shape index: {}]
  %s5 = inlined_call_operand.vmem [shape: f32[8,1], index: 5, kind: output, shape index: {0}]
  %s6 = inlined_call_operand.vmem [shape: f32[8,1], index: 6, kind: output, shape index: {1}]
  %7 = xla_tuple %s5, %s6
  %s8 = sld [smem:[#allocation0]]
  $region38: #{tpu_custom_call.1} parent=0
    _
  %s10 = ssub.s32 1, %s8
  %s11 = scalar_select 0, %s10, %s8
  // Predicated region
  $region2: #{tpu_custom_call.1} parent=0 // pred_check
    _
  $region3: #{tpu_custom_call.1} parent=0 // pred_check_branch
    %13 = sbr.rel (0) target = $region5
  $region4: #{tpu_custom_call.1} parent=0 // pred_region
    _
  $region5: #{tpu_custom_call.1} parent=0 // pred_fallthru
    _
  // Predicated region
  $region6: #{tpu_custom_call.1} parent=0 // pred_check
    _
  $region7: #{tpu_custom_call.1} parent=0 // pred_check_branch
    %15 = sbr.rel (0) target = $region9
  $region8: #{tpu_custom_call.1} parent=0 // pred_region
    _
  $region9: #{tpu_custom_call.1} parent=0 // pred_fallthru
    _
  // Predicated region
  $region10: #{tpu_custom_call.1} parent=0 // pred_check
    _
  $region11: #{tpu_custom_call.1} parent=0 // pred_check_branch
    %17 = sbr.rel (0) target = $region13
  $region12: #{tpu_custom_call.1} parent=0 // pred_region
    _
  $region13: #{tpu_custom_call.1} parent=0 // pred_fallthru
    _
  // Predicated region
  $region14: #{tpu_custom_call.1} parent=0 // pred_check
    _
  $region15: #{tpu_custom_call.1} parent=0 // pred_check_branch
    %19 = sbr.rel (0) target = $region17
  $region16: #{tpu_custom_call.1} parent=0 // pred_region
    _
  $region17: #{tpu_custom_call.1} parent=0 // pred_fallthru
    _
  // Predicated region
  $region18: #{tpu_custom_call.1} parent=0 // pred_check
    _
  $region19: #{tpu_custom_call.1} parent=0 // pred_check_branch
    %21 = sbr.rel (0) target = $region21
  $region20: #{tpu_custom_call.1} parent=0 // pred_region
    _
  $region21: #{tpu_custom_call.1} parent=0 // pred_fallthru
    _
  %v22 = vld [vmem:[%s0] sm:$0xff]
  %v23 = vld [vmem:[%s1] sm:$0xff]
  %v24 = vld [vmem:[%s2] sm:$0xff]
  %v25 = vld [vmem:[%s3] sm:$0xff]
  %v26 = vld [vmem:[%s4] sm:$0xff]
  %v27 = vmul.f32 %v25, 0.5
  %v28 = vmul.f32 %v24, %v24
  %v29 = vmul.f32 %v27, %v28
  %v30 = vmul.f32 %v26, %v26
  %v31 = vmul.f32 %v30, %v26
  %33 = vset.pattern.permute.xlu0 0
  %34 = vperm.xlu0 %33, %v31
  %v35 = vpop.permute.xlu0 %34
  %v37 = vmul.f32 %v35, %v22
  %39 = vset.pattern.permute.xlu0 0
  %40 = vperm.xlu0 %39, %v29
  %v41 = vpop.permute.xlu0 %40
  %v43 = vmul.f32 %v41, %v23
  %v44 = vsub.f32 %v37, %v43
  %v45 = vmul.f32 %v44, %v44
  %vm46 = vcmask 261120
  %v47 = vsel %vm46, %v45, 0.0
  %48 = vadd.xlane.f32.xlu0 %v47
  %v49 = vpop.xlane.xlu0 %48
  %vm50 = vcmask 7168
  %51 = vst.msk [vmem:[%s5] sm:$0xff] %vm50, %v49
  %v52 = vand.u32 2147483647, %v44
  %v53 = vsel %vm46, %v52, 0.0
  %54 = vadd.xlane.f32.xlu0 %v53
  %v55 = vpop.xlane.xlu0 %54
  %56 = vst.msk [vmem:[%s6] sm:$0xff] %vm50, %v55
  // Predicated region
  $region22: #{tpu_custom_call.1} parent=0 // pred_check
    _
  $region23: #{tpu_custom_call.1} parent=0 // pred_check_branch
    %58 = sbr.rel (0) target = $region25
  $region24: #{tpu_custom_call.1} parent=0 // pred_region
    _
  $region25: #{tpu_custom_call.1} parent=0 // pred_fallthru
    _
  // Predicated region
  $region26: #{tpu_custom_call.1} parent=0 // pred_check
    _
  $region27: #{tpu_custom_call.1} parent=0 // pred_check_branch
    %60 = sbr.rel (0) target = $region29
  $region28: #{tpu_custom_call.1} parent=0 // pred_region
    _
  $region29: #{tpu_custom_call.1} parent=0 // pred_fallthru
    _
  // Predicated region
  $region30: #{tpu_custom_call.1} parent=0 // pred_check
    _
  $region31: #{tpu_custom_call.1} parent=0 // pred_check_branch
    %62 = sbr.rel (0) target = $region33
  $region32: #{tpu_custom_call.1} parent=0 // pred_region
    _
  $region33: #{tpu_custom_call.1} parent=0 // pred_fallthru
    _
  // Predicated region
  $region34: #{tpu_custom_call.1} parent=0 // pred_check
    _
  $region35: #{tpu_custom_call.1} parent=0 // pred_check_branch
    %64 = sbr.rel (0) target = $region37
  $region36: #{tpu_custom_call.1} parent=0 // pred_region
    _
  $region37: #{tpu_custom_call.1} parent=0 // pred_fallthru
    _

</llo_original>
